<compile_context>
chip_gen: v5e
topology: v5e:2x2
jax: 0.10.0
libtpu: 0.0.40
codegen_flags: <defaults>
</compile_context>

<pallas_src>
import functools

import jax
import jax.numpy as jnp
from jax.experimental import pallas as pl
from jax.experimental.pallas import tpu as pltpu

_LANE = 128


def _round_up(x: int, m: int) -> int:
    return ((x + m - 1) // m) * m


def _sublane_pack(dtype) -> int:
    # Rows per packed sublane group: 8 for 32-bit, 16 for bf16, 32 for 8-bit.
    return max(8, 32 // jnp.dtype(dtype).itemsize)


def _pick_tile(dim_pad: int, cap: int, quantum: int = _LANE) -> int:
    """Largest multiple of `quantum` that divides dim_pad and is <= cap."""
    t = min(dim_pad, max(quantum, (cap // quantum) * quantum))
    while dim_pad % t:
        t -= quantum
    return t


def _vmem_budget_bytes() -> int:
    """Usable VMEM budget for this chip generation (with headroom)."""
    cap = None
    try:
        info = pltpu.get_tpu_info()
        cap = int(getattr(info, "vmem_capacity_bytes", 0)) or None
    except Exception:
        cap = None
    if cap is None:
        cap = 64 << 20  # conservative (v7x-sized) fallback
    return min(int(cap * 0.85), cap - (8 << 20))


def _num_tensorcores() -> int:
    try:
        info = pltpu.get_tpu_info()
        for name in ("num_tensorcores", "tensorcore_count", "num_cores",
                     "core_count"):
            v = getattr(info, name, None)
            if isinstance(v, int) and v > 0:
                return v
    except Exception:
        pass
    return 1


# --------------------------------------------------------------------------
# Fully-fused path: all weights resident in VMEM, activation never leaves chip.
# --------------------------------------------------------------------------
def _fused_mlp_kernel(*refs, num_layers: int, cdtype):
    # refs = (x_ref, w0, b0, w1, b1, ..., w_{L-1}, b_{L-1}, o_ref)
    x_ref = refs[0]
    o_ref = refs[-1]
    h = x_ref[...]                              # (tm, D0_pad), compute dtype
    for l in range(num_layers):
        w_ref = refs[1 + 2 * l]                 # (Dl_pad, Dl+1_pad), cdtype
        b_ref = refs[2 + 2 * l]                 # (1, Dl+1_pad), f32 (pre-cast)
        acc = jnp.dot(h, w_ref[...], preferred_element_type=jnp.float32)
        acc = acc + b_ref[...]
        if l < num_layers - 1:
            h = jnp.maximum(acc, 0.0).astype(cdtype)   # ReLU, back to MXU dtype
        else:
            o_ref[...] = acc.astype(o_ref.dtype)       # final layer: no ReLU


def _fused_mlp(x_p, weights_p, biases_f32, *, out_dtype, tm, vmem_limit):
    m_pad, d_in_pad = x_p.shape
    d_out_pad = weights_p[-1].shape[1]
    num_layers = len(weights_p)
    cdtype = weights_p[0].dtype

    in_specs = [pl.BlockSpec((tm, d_in_pad), lambda i: (i, 0))]
    flat = []
    for w, b in zip(weights_p, biases_f32):
        kp, np_ = w.shape
        # Grid-invariant -> single-buffered (double-buffering only burns VMEM).
        in_specs.append(pl.BlockSpec((kp, np_), lambda i: (0, 0),
                                     pipeline_mode=pl.Buffered(1)))
        in_specs.append(pl.BlockSpec((1, np_), lambda i: (0, 0),
                                     pipeline_mode=pl.Buffered(1)))
        flat.extend((w, b))

    flops = 2 * m_pad * sum(int(w.shape[0]) * int(w.shape[1]) for w in weights_p)
    bytes_accessed = (int(x_p.size) * x_p.dtype.itemsize
                      + sum(int(w.size) * w.dtype.itemsize for w in weights_p)
                      + sum(int(b.size) * b.dtype.itemsize for b in biases_f32)
                      + m_pad * d_out_pad * jnp.dtype(out_dtype).itemsize)

    kernel = functools.partial(_fused_mlp_kernel, num_layers=num_layers,
                               cdtype=cdtype)
    return pl.pallas_call(
        kernel,
        out_shape=jax.ShapeDtypeStruct((m_pad, d_out_pad), out_dtype),
        grid_spec=pltpu.PrefetchScalarGridSpec(
            num_scalar_prefetch=0,
            grid=(m_pad // tm,),
            in_specs=in_specs,
            out_specs=pl.BlockSpec((tm, d_out_pad), lambda i: (i, 0)),
        ),
        compiler_params=pltpu.CompilerParams(
            dimension_semantics=("parallel",),
            vmem_limit_bytes=int(vmem_limit),
        ),
        cost_estimate=pl.CostEstimate(flops=int(flops), transcendentals=0,
                                      bytes_accessed=int(bytes_accessed)),
    )(x_p, *flat)


# --------------------------------------------------------------------------
# Fallback path (weights too big for VMEM): per-layer tiled matmul + bias(+ReLU)
# --------------------------------------------------------------------------
def _linear_kernel(x_ref, w_ref, b_ref, o_ref, acc_ref, *, relu: bool):
    k = pl.program_id(2)

    @pl.when(k == 0)
    def _():
        acc_ref[...] = jnp.zeros_like(acc_ref)

    acc_ref[...] += jnp.dot(x_ref[...], w_ref[...],
                            preferred_element_type=jnp.float32)

    @pl.when(k == pl.num_programs(2) - 1)
    def _():
        r = acc_ref[...] + b_ref[...]
        if relu:
            r = jnp.maximum(r, 0.0)
        o_ref[...] = r.astype(o_ref.dtype)


def _linear_pallas(x_p, w_p, b_f32, *, relu, out_dtype, tm, budget):
    m_pad, k_pad = x_p.shape
    _, n_pad = w_p.shape
    tn = _pick_tile(n_pad, 512)
    tk = _pick_tile(k_pad, 512)

    csize = x_p.dtype.itemsize
    wsize = w_p.dtype.itemsize
    osize = jnp.dtype(out_dtype).itemsize
    est = (2 * (tm * tk * csize + tk * tn * wsize + tn * 4)
           + 2 * tm * tn * osize + tm * tn * 4 + (4 << 20))
    vmem_limit = max(32 << 20, min(est, budget))

    kernel = functools.partial(_linear_kernel, relu=relu)
    return pl.pallas_call(
        kernel,
        out_shape=jax.ShapeDtypeStruct((m_pad, n_pad), out_dtype),
        grid_spec=pltpu.PrefetchScalarGridSpec(
            num_scalar_prefetch=0,
            grid=(m_pad // tm, n_pad // tn, k_pad // tk),
            in_specs=[
                pl.BlockSpec((tm, tk), lambda i, j, k: (i, k)),
                pl.BlockSpec((tk, tn), lambda i, j, k: (k, j)),
                pl.BlockSpec((1, tn), lambda i, j, k: (0, j)),
            ],
            out_specs=pl.BlockSpec((tm, tn), lambda i, j, k: (i, j)),
            scratch_shapes=[pltpu.VMEM((tm, tn), jnp.float32)],
        ),
        compiler_params=pltpu.CompilerParams(
            dimension_semantics=("parallel", "parallel", "arbitrary"),
            vmem_limit_bytes=int(vmem_limit),
        ),
    )(x_p, w_p, b_f32)


# --------------------------------------------------------------------------
# Top-level forward
# --------------------------------------------------------------------------
def fc_forward(x, weights_p, biases_f32, *, out_dim, out_dtype=None,
               force_streaming=False):
    """y = W_L(...relu(W_1 x + b_1)...) + b_L with lane-dense padded params.

    x:          (M, in_dim)
    weights_p:  list of (K_pad, N_pad) zero-padded weights (fan_in x fan_out),
                in the compute dtype.
    biases_f32: list of (1, N_pad) zero-padded biases, pre-cast to f32.
    """
    M, din = x.shape
    num_layers = len(weights_p)
    cdtype = weights_p[0].dtype
    d_in_pad = weights_p[0].shape[0]
    d_out_pad = weights_p[-1].shape[1]
    dims_pad = [d_in_pad] + [int(w.shape[1]) for w in weights_p]
    if out_dtype is None:
        out_dtype = x.dtype

    pack = _sublane_pack(cdtype)
    csize = jnp.dtype(cdtype).itemsize
    osize = jnp.dtype(out_dtype).itemsize
    budget = _vmem_budget_bytes()
    headroom = 4 << 20

    # VMEM cost of the fully-fused path: single-buffered weights + f32 biases
    # (grid-invariant), plus per-batch-row tile costs.
    wb_bytes = (sum(int(w.size) for w in weights_p) * csize
                + sum(int(b.size) for b in biases_f32) * 4)
    per_row = (2 * d_in_pad * csize                 # x tile, double-buffered
               + 2 * d_out_pad * osize              # out tile, double-buffered
               + max(dims_pad) * (4 + csize))       # f32 activation + cdtype copy

    tm_budget = (budget - headroom - wb_bytes) // max(per_row, 1)
    use_fused = (not force_streaming) and tm_budget >= pack

    if use_fused:
        tm_cap = max(pack, min(512, (tm_budget // pack) * pack))
        tm = min(_round_up(max(M, 1), pack), tm_cap)
        # On dual-TensorCore parts keep >= 2 grid blocks so the "parallel"
        # batch axis actually shards; single-TC parts keep the biggest tile.
        if _num_tensorcores() >= 2 and M >= 2 * pack:
            tm = min(tm, _round_up((M + 1) // 2, pack))
    else:
        tm = min(_round_up(max(M, 1), pack), 256)

    # Feature-pad + cast input; padded columns are zero so the matmul is exact.
    x_p = x.astype(cdtype)
    if din < d_in_pad:
        x_p = jnp.pad(x_p, ((0, 0), (0, d_in_pad - din)))
    m_pad = _round_up(M, tm)
    if m_pad > M:
        x_p = jnp.pad(x_p, ((0, m_pad - M), (0, 0)))

    if use_fused:
        vmem_limit = min(budget, max(32 << 20, wb_bytes + tm * per_row + headroom))
        out = _fused_mlp(x_p, weights_p, biases_f32, out_dtype=out_dtype,
                         tm=tm, vmem_limit=vmem_limit)
    else:
        # TODO(synk): replace this per-layer fallback with an in-kernel
        # streamed-weights pipeline (HBM weights + pltpu.emit_pipeline) so the
        # activation stays in VMEM even when the weight set exceeds VMEM.
        h = x_p
        for l, (w, b) in enumerate(zip(weights_p, biases_f32)):
            last = (l == num_layers - 1)
            h = _linear_pallas(h, w, b, relu=not last,
                               out_dtype=out_dtype if last else cdtype,
                               tm=tm, budget=budget)
        out = h

    if m_pad > M or d_out_pad > out_dim:
        out = out[:M, :out_dim]
    return out


class FCPallas:
    """JAX/Pallas port of the PyTorch FC module (single fused kernel forward)."""

    def __init__(self, in_dim, out_dim, num_hidden_layers, layer_size, key,
                 compute_dtype=jnp.bfloat16):
        self.in_dim = in_dim
        self.out_dim = out_dim
        self.num_hidden_layers = num_hidden_layers
        self.layer_size = layer_size
        self.compute_dtype = compute_dtype

        # Layer sizes mirror the PyTorch ModuleList:
        #   Linear(in_dim, layer_size)
        #   (num_hidden_layers - 1) x Linear(layer_size, layer_size)
        #   Linear(layer_size, out_dim)
        dims = [in_dim] + [layer_size] * num_hidden_layers + [out_dim]
        dims_pad = [_round_up(d, _LANE) for d in dims]

        self.weights = []          # unpadded (fan_in, fan_out) = W.T, f32 (reference)
        self.biases = []
        self.weights_padded = []   # lane-dense, compute dtype (kernel inputs)
        self.biases_padded = []    # lane-dense, f32 (pre-cast; no in-kernel cast)
        for li in range(len(dims) - 1):
            fan_in, fan_out = dims[li], dims[li + 1]
            key, kw, kb = jax.random.split(key, 3)
            bound = 1.0 / float(fan_in) ** 0.5
            # torch.nn.Linear default init: U(-1/sqrt(fan_in), 1/sqrt(fan_in))
            w = jax.random.uniform(kw, (fan_in, fan_out), jnp.float32, -bound, bound)
            b = jax.random.uniform(kb, (fan_out,), jnp.float32, -bound, bound)
            self.weights.append(w)
            self.biases.append(b)

            kp, np_ = dims_pad[li], dims_pad[li + 1]
            wp = jnp.zeros((kp, np_), compute_dtype).at[:fan_in, :fan_out].set(
                w.astype(compute_dtype))
            bp = jnp.zeros((1, np_), jnp.float32).at[0, :fan_out].set(b)
            self.weights_padded.append(wp)
            self.biases_padded.append(bp)

    def __call__(self, x, force_streaming=False):
        x = x.reshape(-1, self.in_dim)
        return fc_forward(x, self.weights_padded, self.biases_padded,
                          out_dim=self.out_dim, out_dtype=x.dtype,
                          force_streaming=force_streaming)


if __name__ == "__main__":
    key = jax.random.PRNGKey(0)
    key, k_in, k_model = jax.random.split(key, 3)

    in_dim, out_dim, num_hidden_layers, layer_size = 32, 16, 2, 64
    batch = 8

    x = jax.random.normal(k_in, (batch, in_dim), jnp.float32)

    def ref_forward(model, xx, cdtype):
        """Pure-JAX reference mimicking the kernel's dtype pipeline."""
        h = xx.reshape(-1, in_dim).astype(cdtype)
        n = len(model.weights)
        out = None
        for i, (w, b) in enumerate(zip(model.weights, model.biases)):
            acc = jnp.dot(h, w.astype(cdtype),
                          preferred_element_type=jnp.float32) + b
            if i < n - 1:
                h = jnp.maximum(acc, 0.0).astype(cdtype)
            else:
                out = acc
        return out.astype(xx.dtype)

    # Default mode: bf16 compute / f32 accumulate, fully-fused single kernel.
    model_bf16 = FCPallas(in_dim, out_dim, num_hidden_layers, layer_size, k_model)
    y_bf16 = model_bf16(x)
    jax.block_until_ready(y_bf16)
    assert y_bf16.shape == (batch, out_dim), y_bf16.shape

    ref_bf16 = ref_forward(model_bf16, x, jnp.bfloat16)
    ref_f32 = ref_forward(model_bf16, x, jnp.float32)
    assert jnp.allclose(y_bf16, ref_bf16, atol=2e-3, rtol=2e-3), \
        float(jnp.abs(y_bf16 - ref_bf16).max())
    assert jnp.allclose(y_bf16, ref_f32, atol=1e-1, rtol=1e-1), \
        float(jnp.abs(y_bf16 - ref_f32).max())

    # Exactness mode: f32 compute, fully-fused single kernel, tight tolerance.
    model_f32 = FCPallas(in_dim, out_dim, num_hidden_layers, layer_size, k_model,
                         compute_dtype=jnp.float32)
    y_f32 = model_f32(x)
    jax.block_until_ready(y_f32)
    assert y_f32.shape == (batch, out_dim), y_f32.shape
    assert jnp.allclose(y_f32, ref_f32, atol=1e-5, rtol=1e-5), \
        float(jnp.abs(y_f32 - ref_f32).max())

    # Fallback path (used when weights exceed the per-generation VMEM budget).
    y_stream = model_f32(x, force_streaming=True)
    jax.block_until_ready(y_stream)
    assert jnp.allclose(y_stream, ref_f32, atol=1e-4, rtol=1e-4), \
        float(jnp.abs(y_stream - ref_f32).max())

    print("KERNEL_OK")
</pallas_src>

<mosaic_0001>
module attributes {stable_mosaic.version = 11 : i64} {
  func.func @_fused_mlp_kernel(%arg0: i32, %arg1: memref<16x128xbf16, #tpu.memory_space<vmem>>, %arg2: memref<128x128xbf16, #tpu.memory_space<vmem>>, %arg3: memref<1x128xf32, #tpu.memory_space<vmem>>, %arg4: memref<128x128xbf16, #tpu.memory_space<vmem>>, %arg5: memref<1x128xf32, #tpu.memory_space<vmem>>, %arg6: memref<128x128xbf16, #tpu.memory_space<vmem>>, %arg7: memref<1x128xf32, #tpu.memory_space<vmem>>, %arg8: memref<16x128xf32, #tpu.memory_space<vmem>>) attributes {dimension_semantics = [#tpu.dimension_semantics<parallel>], iteration_bounds = array<i64: 1>, scalar_prefetch = 0 : i64, scratch_operands = 0 : i64, tpu.core_type = #tpu.core_type<tc>, window_params = [{transform_indices = @transform_0, window_bounds = array<i64: 16, 128>}, {pipeline_mode = #tpu.pipeline_mode<synchronous>, transform_indices = @transform_1, window_bounds = array<i64: 128, 128>}, {pipeline_mode = #tpu.pipeline_mode<synchronous>, transform_indices = @transform_2, window_bounds = array<i64: 1, 128>}, {pipeline_mode = #tpu.pipeline_mode<synchronous>, transform_indices = @transform_3, window_bounds = array<i64: 128, 128>}, {pipeline_mode = #tpu.pipeline_mode<synchronous>, transform_indices = @transform_4, window_bounds = array<i64: 1, 128>}, {pipeline_mode = #tpu.pipeline_mode<synchronous>, transform_indices = @transform_5, window_bounds = array<i64: 128, 128>}, {pipeline_mode = #tpu.pipeline_mode<synchronous>, transform_indices = @transform_6, window_bounds = array<i64: 1, 128>}, {transform_indices = @transform_7, window_bounds = array<i64: 16, 128>}]} {
    %c0 = arith.constant 0 : index
    %c0_0 = arith.constant 0 : index
    %0 = vector.load %arg1[%c0, %c0_0] : memref<16x128xbf16, #tpu.memory_space<vmem>>, vector<16x128xbf16>
    %c0_1 = arith.constant 0 : index
    %c0_2 = arith.constant 0 : index
    %1 = vector.load %arg2[%c0_1, %c0_2] : memref<128x128xbf16, #tpu.memory_space<vmem>>, vector<128x128xbf16>
    %cst = arith.constant dense<0.000000e+00> : vector<16x128xf32>
    %2 = tpu.matmul %0, %1, %cst {dimension_numbers = #tpu.dot_dimension_numbers<[1], [0], [0], [1], [0, 0, 1, 1], [], []>} : vector<16x128xbf16>, vector<128x128xbf16>, vector<16x128xf32> -> vector<16x128xf32>
    %c0_3 = arith.constant 0 : index
    %c0_4 = arith.constant 0 : index
    %3 = vector.load %arg3[%c0_3, %c0_4] : memref<1x128xf32, #tpu.memory_space<vmem>>, vector<1x128xf32>
    %4 = vector.broadcast %3 : vector<1x128xf32> to vector<16x128xf32>
    %5 = arith.addf %2, %4 : vector<16x128xf32>
    %cst_5 = arith.constant 0.000000e+00 : f32
    %6 = vector.broadcast %cst_5 : f32 to vector<16x128xf32>
    %7 = arith.maximumf %5, %6 : vector<16x128xf32>
    %8 = arith.truncf %7 : vector<16x128xf32> to vector<16x128xbf16>
    %c0_6 = arith.constant 0 : index
    %c0_7 = arith.constant 0 : index
    %9 = vector.load %arg4[%c0_6, %c0_7] : memref<128x128xbf16, #tpu.memory_space<vmem>>, vector<128x128xbf16>
    %cst_8 = arith.constant dense<0.000000e+00> : vector<16x128xf32>
    %10 = tpu.matmul %8, %9, %cst_8 {dimension_numbers = #tpu.dot_dimension_numbers<[1], [0], [0], [1], [0, 0, 1, 1], [], []>} : vector<16x128xbf16>, vector<128x128xbf16>, vector<16x128xf32> -> vector<16x128xf32>
    %c0_9 = arith.constant 0 : index
    %c0_10 = arith.constant 0 : index
    %11 = vector.load %arg5[%c0_9, %c0_10] : memref<1x128xf32, #tpu.memory_space<vmem>>, vector<1x128xf32>
    %12 = vector.broadcast %11 : vector<1x128xf32> to vector<16x128xf32>
    %13 = arith.addf %10, %12 : vector<16x128xf32>
    %cst_11 = arith.constant 0.000000e+00 : f32
    %14 = vector.broadcast %cst_11 : f32 to vector<16x128xf32>
    %15 = arith.maximumf %13, %14 : vector<16x128xf32>
    %16 = arith.truncf %15 : vector<16x128xf32> to vector<16x128xbf16>
    %c0_12 = arith.constant 0 : index
    %c0_13 = arith.constant 0 : index
    %17 = vector.load %arg6[%c0_12, %c0_13] : memref<128x128xbf16, #tpu.memory_space<vmem>>, vector<128x128xbf16>
    %cst_14 = arith.constant dense<0.000000e+00> : vector<16x128xf32>
    %18 = tpu.matmul %16, %17, %cst_14 {dimension_numbers = #tpu.dot_dimension_numbers<[1], [0], [0], [1], [0, 0, 1, 1], [], []>} : vector<16x128xbf16>, vector<128x128xbf16>, vector<16x128xf32> -> vector<16x128xf32>
    %c0_15 = arith.constant 0 : index
    %c0_16 = arith.constant 0 : index
    %19 = vector.load %arg7[%c0_15, %c0_16] : memref<1x128xf32, #tpu.memory_space<vmem>>, vector<1x128xf32>
    %20 = vector.broadcast %19 : vector<1x128xf32> to vector<16x128xf32>
    %21 = arith.addf %18, %20 : vector<16x128xf32>
    %c0_17 = arith.constant 0 : index
    %c0_18 = arith.constant 0 : index
    %22 = vector.load %arg8[%c0_17, %c0_18] : memref<16x128xf32, #tpu.memory_space<vmem>>, vector<16x128xf32>
    tpu.vector_store %arg8[%c0_17, %c0_18], %21 {strides = array<i32>} : memref<16x128xf32, #tpu.memory_space<vmem>>, vector<16x128xf32>,
    return
  }
  func.func @transform_0(%arg0: i32) -> (i32, i32) {
    %c0_i32 = arith.constant 0 : i32
    %c0_i32_0 = arith.constant 0 : i32
    return %arg0, %c0_i32 : i32, i32
  }
  func.func @transform_1(%arg0: i32) -> (i32, i32) {
    %c0_i32 = arith.constant 0 : i32
    %c0_i32_0 = arith.constant 0 : i32
    %c0_i32_1 = arith.constant 0 : i32
    return %c0_i32, %c0_i32_0 : i32, i32
  }
  func.func @transform_2(%arg0: i32) -> (i32, i32) {
    %c0_i32 = arith.constant 0 : i32
    %c0_i32_0 = arith.constant 0 : i32
    %c0_i32_1 = arith.constant 0 : i32
    return %c0_i32, %c0_i32_0 : i32, i32
  }
  func.func @transform_3(%arg0: i32) -> (i32, i32) {
    %c0_i32 = arith.constant 0 : i32
    %c0_i32_0 = arith.constant 0 : i32
    %c0_i32_1 = arith.constant 0 : i32
    return %c0_i32, %c0_i32_0 : i32, i32
  }
  func.func @transform_4(%arg0: i32) -> (i32, i32) {
    %c0_i32 = arith.constant 0 : i32
    %c0_i32_0 = arith.constant 0 : i32
    %c0_i32_1 = arith.constant 0 : i32
    return %c0_i32, %c0_i32_0 : i32, i32
  }
  func.func @transform_5(%arg0: i32) -> (i32, i32) {
    %c0_i32 = arith.constant 0 : i32
    %c0_i32_0 = arith.constant 0 : i32
    %c0_i32_1 = arith.constant 0 : i32
    return %c0_i32, %c0_i32_0 : i32, i32
  }
  func.func @transform_6(%arg0: i32) -> (i32, i32) {
    %c0_i32 = arith.constant 0 : i32
    %c0_i32_0 = arith.constant 0 : i32
    %c0_i32_1 = arith.constant 0 : i32
    return %c0_i32, %c0_i32_0 : i32, i32
  }
  func.func @transform_7(%arg0: i32) -> (i32, i32) {
    %c0_i32 = arith.constant 0 : i32
    %c0_i32_0 = arith.constant 0 : i32
    return %arg0, %c0_i32 : i32, i32
  }
}

</mosaic_0001>

<llo_original>
// kernel: tpu_custom_call.1
$region0: #{tpu_custom_call.1}
  #allocation0 [shape = 'u32[]', space=smem, size = 0x4, offset = 0x4, fixed_abs, tag = 'smem constant byte address 0x4 - core index']
  #allocation1 [shape = 'u32[72,128]{1,0:T(1,128)}', space=vmem, size = 0x9000, scoped, tag = 'internal scratch']
  %s0 = inlined_call_operand.hbm [shape: bf16[16,128], index: 0, kind: input, shape index: {}]
  %s1 = inlined_call_operand.hbm [shape: bf16[128,128], index: 1, kind: input, shape index: {}]
  %s2 = inlined_call_operand.vmem [shape: f32[1,128], index: 2, kind: input, shape index: {}]
  %s3 = inlined_call_operand.hbm [shape: bf16[128,128], index: 3, kind: input, shape index: {}]
  %s4 = inlined_call_operand.vmem [shape: f32[1,128], index: 4, kind: input, shape index: {}]
  %s5 = inlined_call_operand.hbm [shape: bf16[128,128], index: 5, kind: input, shape index: {}]
  %s6 = inlined_call_operand.vmem [shape: f32[1,128], index: 6, kind: input, shape index: {}]
  %s7 = inlined_call_operand.hbm [shape: f32[16,128], index: 7, kind: output, shape index: {}]
  %s8 = sld [smem:[#allocation0]]
  $region54: #{tpu_custom_call.1} parent=0
    _
  %s10 = ssub.s32 1, %s8
  %s11 = scalar_select 0, %s10, %s8
  $region1: #{tpu_custom_call.1} parent=0
    #allocation2 [shape = 'u8[4096]{0}', space=vmem, size = 0x1000, scoped, tag = 'input window, operand 0, single buffered']
    #allocation3 [shape = 's32[1]{0}', space=sflag, size = 0x4, scoped, tag = 'scoped memory for tpu_custom_call.1']
    #allocation4 [shape = 's32[1]{0}', space=sflag, size = 0x4, scoped, tag = 'scoped memory for tpu_custom_call.1']
    #allocation5 [shape = 'u8[32768]{0}', space=vmem, size = 0x8000, scoped, tag = 'input window, operand 1, single buffered']
    #allocation6 [shape = 's32[1]{0}', space=sflag, size = 0x4, scoped, tag = 'scoped memory for tpu_custom_call.1']
    #allocation7 [shape = 'u8[32768]{0}', space=vmem, size = 0x8000, scoped, tag = 'input window, operand 3, single buffered']
    #allocation8 [shape = 'u8[32768]{0}', space=vmem, size = 0x8000, scoped, tag = 'input window, operand 5, single buffered']
    #allocation9 [shape = 's32[1]{0}', space=sflag, size = 0x4, scoped, tag = 'scoped memory for tpu_custom_call.1']
    #allocation10 [shape = 'u8[8192]{0}', space=vmem, size = 0x2000, scoped, tag = 'output window, operand 0, single buffered']
    %12 = vsyncpa [#allocation3], 0
    %13 = vsyncpa [#allocation6], 0
    %14 = vsyncpa [#allocation9], 0
    %15 = vsyncpa [#allocation4], 0
    // Predicated region
    $region2: #{tpu_custom_call.1} parent=1 // pred_check
      _
    $region3: #{tpu_custom_call.1} parent=1 // pred_check_branch
      %17 = sbr.rel (0) target = $region5
    $region4: #{tpu_custom_call.1} parent=1 // pred_region
      %19 = vsyncadd [#allocation3], 0
      %s20 = sshll.u32 %s0, 4
      %s21 = int_to_ptr.hbm [resolvable:$true] %s20
      %s22 = sshll.u32 [#allocation2], 4
      %s23 = int_to_ptr.vmem [resolvable:$true] %s22
      %28 = dma.hbm_to_vmem [thread:$0]  %s21, 128, %s23, [#allocation3], 64, 64, 4
    $region5: #{tpu_custom_call.1} parent=1 // pred_fallthru
      _
    // Predicated region
    $region6: #{tpu_custom_call.1} parent=1 // pred_check
      _
    $region7: #{tpu_custom_call.1} parent=1 // pred_check_branch
      %30 = sbr.rel (0) target = $region9
    $region8: #{tpu_custom_call.1} parent=1 // pred_region
      %32 = vsyncadd [#allocation6], 0
      %s33 = sshll.u32 %s1, 4
      %s34 = int_to_ptr.hbm [resolvable:$true] %s33
      %s35 = sshll.u32 [#allocation5], 4
      %s36 = int_to_ptr.vmem [resolvable:$true] %s35
      %41 = dma.hbm_to_vmem [thread:$0]  %s34, 1024, %s36, [#allocation6], 64, 64, 4
    $region9: #{tpu_custom_call.1} parent=1 // pred_fallthru
      _
    // Predicated region
    $region10: #{tpu_custom_call.1} parent=1 // pred_check
      _
    $region11: #{tpu_custom_call.1} parent=1 // pred_check_branch
      %43 = sbr.rel (0) target = $region13
    $region12: #{tpu_custom_call.1} parent=1 // pred_region
      _
    $region13: #{tpu_custom_call.1} parent=1 // pred_fallthru
      _
    // Predicated region
    $region14: #{tpu_custom_call.1} parent=1 // pred_check
      _
    $region15: #{tpu_custom_call.1} parent=1 // pred_check_branch
      %45 = sbr.rel (0) target = $region17
    $region16: #{tpu_custom_call.1} parent=1 // pred_region
      %47 = vsyncadd [#allocation6], 0
      %s48 = sshll.u32 %s3, 4
      %s49 = int_to_ptr.hbm [resolvable:$true] %s48
      %s50 = sshll.u32 [#allocation7], 4
      %s51 = int_to_ptr.vmem [resolvable:$true] %s50
      %56 = dma.hbm_to_vmem [thread:$0]  %s49, 1024, %s51, [#allocation6], 64, 64, 4
    $region17: #{tpu_custom_call.1} parent=1 // pred_fallthru
      _
    // Predicated region
    $region18: #{tpu_custom_call.1} parent=1 // pred_check
      _
    $region19: #{tpu_custom_call.1} parent=1 // pred_check_branch
      %58 = sbr.rel (0) target = $region21
    $region20: #{tpu_custom_call.1} parent=1 // pred_region
      _
    $region21: #{tpu_custom_call.1} parent=1 // pred_fallthru
      _
    // Predicated region
    $region22: #{tpu_custom_call.1} parent=1 // pred_check
      _
    $region23: #{tpu_custom_call.1} parent=1 // pred_check_branch
      %60 = sbr.rel (0) target = $region25
    $region24: #{tpu_custom_call.1} parent=1 // pred_region
      %62 = vsyncadd [#allocation9], 0
      %s63 = sshll.u32 %s5, 4
      %s64 = int_to_ptr.hbm [resolvable:$true] %s63
      %s65 = sshll.u32 [#allocation8], 4
      %s66 = int_to_ptr.vmem [resolvable:$true] %s65
      %71 = dma.hbm_to_vmem [thread:$0]  %s64, 1024, %s66, [#allocation9], 64, 64, 4
    $region25: #{tpu_custom_call.1} parent=1 // pred_fallthru
      _
    // Predicated region
    $region26: #{tpu_custom_call.1} parent=1 // pred_check
      _
    $region27: #{tpu_custom_call.1} parent=1 // pred_check_branch
      %73 = sbr.rel (0) target = $region29
    $region28: #{tpu_custom_call.1} parent=1 // pred_region
      _
    $region29: #{tpu_custom_call.1} parent=1 // pred_fallthru
      _
    // Predicated region
    $region30: #{tpu_custom_call.1} parent=1 // pred_check
      _
    $region31: #{tpu_custom_call.1} parent=1 // pred_check_branch
      %75 = sbr.rel (0) target = $region33
    $region32: #{tpu_custom_call.1} parent=1 // pred_region
      %77 = dma.done [#allocation3], 128
    $region33: #{tpu_custom_call.1} parent=1 // pred_fallthru
      _
    // Predicated region
    $region34: #{tpu_custom_call.1} parent=1 // pred_check
      _
    $region35: #{tpu_custom_call.1} parent=1 // pred_check_branch
      %79 = sbr.rel (0) target = $region37
    $region36: #{tpu_custom_call.1} parent=1 // pred_region
      %81 = dma.done [#allocation6], 1024
    $region37: #{tpu_custom_call.1} parent=1 // pred_fallthru
      _
    // Predicated region
    $region38: #{tpu_custom_call.1} parent=1 // pred_check
      _
    $region39: #{tpu_custom_call.1} parent=1 // pred_check_branch
      %83 = sbr.rel (0) target = $region41
    $region40: #{tpu_custom_call.1} parent=1 // pred_region
      %85 = dma.done [#allocation6], 1024
    $region41: #{tpu_custom_call.1} parent=1 // pred_fallthru
      _
    // Predicated region
    $region42: #{tpu_custom_call.1} parent=1 // pred_check
      _
    $region43: #{tpu_custom_call.1} parent=1 // pred_check_branch
      %87 = sbr.rel (0) target = $region45
    $region44: #{tpu_custom_call.1} parent=1 // pred_region
      %89 = dma.done [#allocation9], 1024
    $region45: #{tpu_custom_call.1} parent=1 // pred_fallthru
      _
    %v90 = vld [vmem:[#allocation2] sm:$0xf]
    %v91 = vld [vmem:[#allocation2 + $0x4] sm:$0xf]
    %v92 = vld [vmem:[#allocation5] sm:$0xf]
    %v93 = vld [vmem:[#allocation5 + $0x4] sm:$0xf]
    %v94 = vld [vmem:[#allocation5 + $0x8] sm:$0xf]
    %v95 = vld [vmem:[#allocation5 + $0xc] sm:$0xf]
    %v96 = vld [vmem:[#allocation5 + $0x10] sm:$0xf]
    %v97 = vld [vmem:[#allocation5 + $0x14] sm:$0xf]
    %v98 = vld [vmem:[#allocation5 + $0x18] sm:$0xf]
    %v99 = vld [vmem:[#allocation5 + $0x1c] sm:$0xf]
    %v100 = vld [vmem:[#allocation5 + $0x20] sm:$0xf]
    %v101 = vld [vmem:[#allocation5 + $0x24] sm:$0xf]
    %v102 = vld [vmem:[#allocation5 + $0x28] sm:$0xf]
    %v103 = vld [vmem:[#allocation5 + $0x2c] sm:$0xf]
    %v104 = vld [vmem:[#allocation5 + $0x30] sm:$0xf]
    %v105 = vld [vmem:[#allocation5 + $0x34] sm:$0xf]
    %v106 = vld [vmem:[#allocation5 + $0x38] sm:$0xf]
    %v107 = vld [vmem:[#allocation5 + $0x3c] sm:$0xf]
    %v108 = vld [vmem:[%s2] sm:$0x1]
    %v110 = vperm.slane %v108, 0
    %v114 = vunpack.c.l.b16 %v90
    %v115 = vunpack.c.l.b16 %v91
    %v116 = vpack.c.b16 %v115, %v114
    %v134 = vunpack.c.l.b16 %v92
    %v135 = vunpack.c.l.b16 %v93
    %v136 = vunpack.c.l.b16 %v94
    %v137 = vunpack.c.l.b16 %v95
    %v138 = vunpack.c.l.b16 %v96
    %v139 = vunpack.c.l.b16 %v97
    %v140 = vunpack.c.l.b16 %v98
    %v141 = vunpack.c.l.b16 %v99
    %v142 = vunpack.c.l.b16 %v100
    %v143 = vunpack.c.l.b16 %v101
    %v144 = vunpack.c.l.b16 %v102
    %v145 = vunpack.c.l.b16 %v103
    %v146 = vunpack.c.l.b16 %v104
    %v147 = vunpack.c.l.b16 %v105
    %v148 = vunpack.c.l.b16 %v106
    %v149 = vunpack.c.l.b16 %v107
    %v150 = vpack.c.b16 %v135, %v134
    %v151 = vpack.c.b16 %v137, %v136
    %v152 = vpack.c.b16 %v139, %v138
    %v153 = vpack.c.b16 %v141, %v140
    %v154 = vpack.c.b16 %v143, %v142
    %v155 = vpack.c.b16 %v145, %v144
    %v156 = vpack.c.b16 %v147, %v146
    %v157 = vpack.c.b16 %v149, %v148
    %166 = vmatpush.bf16.msra.mxu0 %v157
    %167 = vmatpush.bf16.msra.mxu0 %v156
    %168 = vmatpush.bf16.msra.mxu0 %v155
    %169 = vmatpush.bf16.msra.mxu0 %v154
    %170 = vmatpush.bf16.msra.mxu0 %v153
    %171 = vmatpush.bf16.msra.mxu0 %v152
    %172 = vmatpush.bf16.msra.mxu0 %v151
    %173 = vmatpush.bf16.msra.mxu0 %v150
    %174 = vmatmul.bf16.gmra.mxu0 %v116
    %v175 = vpop.f32.mrf.mxu0
    %v176 = vadd.f32 %v110, %v175
    %v177 = vpop.f32.mrf.mxu0
    %v178 = vadd.f32 %v110, %v177
    %179 = vdwg.mxu0
    %v180 = vmax.f32 %v176, 0.0
    %v181 = vmax.f32 %v178, 0.0
    %v182 = vpack.c.bf16 %v181, %v180
    %v183 = vld [vmem:[#allocation7] sm:$0xf]
    %v184 = vld [vmem:[#allocation7 + $0x4] sm:$0xf]
    %v185 = vld [vmem:[#allocation7 + $0x8] sm:$0xf]
    %v186 = vld [vmem:[#allocation7 + $0xc] sm:$0xf]
    %v187 = vld [vmem:[#allocation7 + $0x10] sm:$0xf]
    %v188 = vld [vmem:[#allocation7 + $0x14] sm:$0xf]
    %v189 = vld [vmem:[#allocation7 + $0x18] sm:$0xf]
    %v190 = vld [vmem:[#allocation7 + $0x1c] sm:$0xf]
    %v191 = vld [vmem:[#allocation7 + $0x20] sm:$0xf]
    %v192 = vld [vmem:[#allocation7 + $0x24] sm:$0xf]
    %v193 = vld [vmem:[#allocation7 + $0x28] sm:$0xf]
    %v194 = vld [vmem:[#allocation7 + $0x2c] sm:$0xf]
    %v195 = vld [vmem:[#allocation7 + $0x30] sm:$0xf]
    %v196 = vld [vmem:[#allocation7 + $0x34] sm:$0xf]
    %v197 = vld [vmem:[#allocation7 + $0x38] sm:$0xf]
    %v198 = vld [vmem:[#allocation7 + $0x3c] sm:$0xf]
    %v199 = vld [vmem:[%s4] sm:$0x1]
    %v201 = vperm.slane %v199, 0
    %v219 = vunpack.c.l.b16 %v183
    %v220 = vunpack.c.l.b16 %v184
    %v221 = vunpack.c.l.b16 %v185
    %v222 = vunpack.c.l.b16 %v186
    %v223 = vunpack.c.l.b16 %v187
    %v224 = vunpack.c.l.b16 %v188
    %v225 = vunpack.c.l.b16 %v189
    %v226 = vunpack.c.l.b16 %v190
    %v227 = vunpack.c.l.b16 %v191
    %v228 = vunpack.c.l.b16 %v192
    %v229 = vunpack.c.l.b16 %v193
    %v230 = vunpack.c.l.b16 %v194
    %v231 = vunpack.c.l.b16 %v195
    %v232 = vunpack.c.l.b16 %v196
    %v233 = vunpack.c.l.b16 %v197
    %v234 = vunpack.c.l.b16 %v198
    %v235 = vpack.c.b16 %v220, %v219
    %v236 = vpack.c.b16 %v222, %v221
    %v237 = vpack.c.b16 %v224, %v223
    %v238 = vpack.c.b16 %v226, %v225
    %v239 = vpack.c.b16 %v228, %v227
    %v240 = vpack.c.b16 %v230, %v229
    %v241 = vpack.c.b16 %v232, %v231
    %v242 = vpack.c.b16 %v234, %v233
    %251 = vmatpush.bf16.msra.mxu0 %v242
    %252 = vmatpush.bf16.msra.mxu0 %v241
    %253 = vmatpush.bf16.msra.mxu0 %v240
    %254 = vmatpush.bf16.msra.mxu0 %v239
    %255 = vmatpush.bf16.msra.mxu0 %v238
    %256 = vmatpush.bf16.msra.mxu0 %v237
    %257 = vmatpush.bf16.msra.mxu0 %v236
    %258 = vmatpush.bf16.msra.mxu0 %v235
    %259 = vmatmul.bf16.gmra.mxu0 %v182
    %v260 = vpop.f32.mrf.mxu0
    %v261 = vadd.f32 %v201, %v260
    %v262 = vpop.f32.mrf.mxu0
    %v263 = vadd.f32 %v201, %v262
    %264 = vdwg.mxu0
    %v265 = vmax.f32 %v261, 0.0
    %v266 = vmax.f32 %v263, 0.0
    %v267 = vpack.c.bf16 %v266, %v265
    %v268 = vld [vmem:[#allocation8] sm:$0xf]
    %v269 = vld [vmem:[#allocation8 + $0x4] sm:$0xf]
    %v270 = vld [vmem:[#allocation8 + $0x8] sm:$0xf]
    %v271 = vld [vmem:[#allocation8 + $0xc] sm:$0xf]
    %v272 = vld [vmem:[#allocation8 + $0x10] sm:$0xf]
    %v273 = vld [vmem:[#allocation8 + $0x14] sm:$0xf]
    %v274 = vld [vmem:[#allocation8 + $0x18] sm:$0xf]
    %v275 = vld [vmem:[#allocation8 + $0x1c] sm:$0xf]
    %v276 = vld [vmem:[#allocation8 + $0x20] sm:$0xf]
    %v277 = vld [vmem:[#allocation8 + $0x24] sm:$0xf]
    %v278 = vld [vmem:[#allocation8 + $0x28] sm:$0xf]
    %v279 = vld [vmem:[#allocation8 + $0x2c] sm:$0xf]
    %v280 = vld [vmem:[#allocation8 + $0x30] sm:$0xf]
    %v281 = vld [vmem:[#allocation8 + $0x34] sm:$0xf]
    %v282 = vld [vmem:[#allocation8 + $0x38] sm:$0xf]
    %v283 = vld [vmem:[#allocation8 + $0x3c] sm:$0xf]
    %v284 = vld [vmem:[%s6] sm:$0x1]
    %v286 = vperm.slane %v284, 0
    %v304 = vunpack.c.l.b16 %v268
    %v305 = vunpack.c.l.b16 %v269
    %v306 = vunpack.c.l.b16 %v270
    %v307 = vunpack.c.l.b16 %v271
    %v308 = vunpack.c.l.b16 %v272
    %v309 = vunpack.c.l.b16 %v273
    %v310 = vunpack.c.l.b16 %v274
    %v311 = vunpack.c.l.b16 %v275
    %v312 = vunpack.c.l.b16 %v276
    %v313 = vunpack.c.l.b16 %v277
    %v314 = vunpack.c.l.b16 %v278
    %v315 = vunpack.c.l.b16 %v279
    %v316 = vunpack.c.l.b16 %v280
    %v317 = vunpack.c.l.b16 %v281
    %v318 = vunpack.c.l.b16 %v282
    %v319 = vunpack.c.l.b16 %v283
    %v320 = vpack.c.b16 %v305, %v304
    %v321 = vpack.c.b16 %v307, %v306
    %v322 = vpack.c.b16 %v309, %v308
    %v323 = vpack.c.b16 %v311, %v310
    %v324 = vpack.c.b16 %v313, %v312
    %v325 = vpack.c.b16 %v315, %v314
    %v326 = vpack.c.b16 %v317, %v316
    %v327 = vpack.c.b16 %v319, %v318
    %336 = vmatpush.bf16.msra.mxu0 %v327
    %337 = vmatpush.bf16.msra.mxu0 %v326
    %338 = vmatpush.bf16.msra.mxu0 %v325
    %339 = vmatpush.bf16.msra.mxu0 %v324
    %340 = vmatpush.bf16.msra.mxu0 %v323
    %341 = vmatpush.bf16.msra.mxu0 %v322
    %342 = vmatpush.bf16.msra.mxu0 %v321
    %343 = vmatpush.bf16.msra.mxu0 %v320
    %344 = vmatmul.bf16.gmra.mxu0 %v267
    %v345 = vpop.f32.mrf.mxu0
    %v346 = vadd.f32 %v286, %v345
    %v347 = vpop.f32.mrf.mxu0
    %v348 = vadd.f32 %v286, %v347
    %349 = vdwg.mxu0
    %350 = vst [vmem:[#allocation10] sm:$0xff] %v346
    %351 = vst [vmem:[#allocation10 + $0x8] sm:$0xff] %v348
    // Predicated region
    $region46: #{tpu_custom_call.1} parent=1 // pred_check
      _
    $region47: #{tpu_custom_call.1} parent=1 // pred_check_branch
      %353 = sbr.rel (0) target = $region49
    $region48: #{tpu_custom_call.1} parent=1 // pred_region
      %355 = vsyncadd [#allocation4], 0
      %s356 = sshll.u32 [#allocation10], 4
      %s357 = int_to_ptr.vmem [resolvable:$true] %s356
      %s358 = sshll.u32 %s7, 4
      %s359 = int_to_ptr.hbm [resolvable:$true] %s358
      %364 = dma.vmem_to_hbm [thread:$0]  %s357, 256, %s359, [#allocation4], 128, 128, 8
    $region49: #{tpu_custom_call.1} parent=1 // pred_fallthru
      _
    // Predicated region
    $region50: #{tpu_custom_call.1} parent=1 // pred_check
      _
    $region51: #{tpu_custom_call.1} parent=1 // pred_check_branch
      %366 = sbr.rel (0) target = $region53
    $region52: #{tpu_custom_call.1} parent=1 // pred_region
      %368 = dma.done [#allocation4], 256
    $region53: #{tpu_custom_call.1} parent=1 // pred_fallthru
      _
    %369 = vsyncpa [#allocation3], 1
    %370 = vsyncpa [#allocation6], 1
    %371 = vsyncpa [#allocation9], 1
    %372 = vsyncpa [#allocation4], 1

</llo_original>
